<compile_context>
chip_gen: v5e
topology: v5e:2x2
jax: 0.10.0
libtpu: 0.0.40
codegen_flags: <defaults>
</compile_context>

<pallas_src>
import functools

import jax
import jax.numpy as jnp
from jax.experimental import pallas as pl
from jax.experimental.pallas import tpu as pltpu


# ----------------------------- glue (plain JAX) -----------------------------

def l2normalize(v, eps=1e-12):
    return v / (jnp.linalg.norm(v) + eps)


def spectral_normalize(w_bar, u, v, power_iterations=1):
    """SpectralNorm._update_u_v (forward only; u/v state not persisted)."""
    h = w_bar.shape[0]
    w_mat = w_bar.reshape(h, -1)
    for _ in range(power_iterations):
        v = l2normalize(w_mat.T @ u)
        u = l2normalize(w_mat @ v)
    sigma = u @ (w_mat @ v)
    return w_bar / sigma


# ------------------ fused 'same' conv kernel (stride=1, 2*pad=k-1) ------------------
#
# x is flattened to (Cin, H*W).  The kernel builds a zero-padded copy in VMEM with a
# 128-lane-aligned margin; tap (kh, kw) with dy = kh - pad, dx = kw - pad is the flat
# window xpad[:, margin + dy*W + dx : ... + HW].  Row overflow lands in the zero
# margin; column wrap is zeroed by a per-dx lane mask applied while stacking the taps
# into a single (Cin*k*k, HW) operand for one MXU matmul.  Output (Cout, H*W) keeps
# the spatial dim on lanes (lane-dense stores, free NCHW reshape).

def _same_conv_kernel(x_ref, w_ref, m_ref, b_ref, o_ref, xpad_ref, p_ref,
                      *, H, W, ksize, pad, margin):
    HW = H * W
    cin = x_ref.shape[1]

    # Zero-padded flat plane built in VMEM: x is read from HBM exactly once, in f32
    # (no wrapper-side cast/pad pre-pass).  `margin` is a multiple of 128, so the
    # data store below is lane-tile aligned.
    xpad_ref[...] = jnp.zeros_like(xpad_ref)
    xpad_ref[:, margin:margin + HW] = x_ref[0]

    # Stack the k*k shifted windows into one (Cin*k*k, HW) operand.  Each window is
    # read exactly once; the dx column-wrap mask is applied while stacking.
    for kh in range(ksize):
        dy = kh - pad
        for kw in range(ksize):
            dx = kw - pad
            tap = kh * ksize + kw
            off = margin + dy * W + dx                   # static python int >= 0
            xwin = xpad_ref[:, off:off + HW]             # (Cin, HW) f32
            if dx != 0:
                xwin = xwin * m_ref[kw:kw + 1, :]        # zero wrapped columns
            p_ref[tap * cin:(tap + 1) * cin, :] = xwin

    # Single K = Cin*k*k matmul (bf16 operands, f32 accumulation) instead of k*k
    # tiny K=Cin matmuls.
    acc = jnp.dot(w_ref[...], p_ref[...].astype(jnp.bfloat16),
                  preferred_element_type=jnp.float32)
    acc = acc + b_ref[...]                               # (Cout,1) bcast over lanes
    acc = jnp.where(acc >= 0.0, acc, 0.2 * acc)          # LeakyReLU(0.2)
    o_ref[0] = acc.astype(o_ref.dtype)


def conv_same_fused(x, w, bias, *, ksize, pad, out_dtype=jnp.float32):
    """x: (N,Cin,H,W) f32; w: (Cout,Cin,k,k) f32 (spectrally normed); bias: (Cout,).
    Returns (N, Cout, H*W).  Set out_dtype=bf16 if the consumer takes bf16 (halves
    output HBM writeback); bias + LeakyReLU are computed in f32 either way."""
    N, Cin, H, W = x.shape
    Cout = w.shape[0]
    HW = H * W
    padf = pad * (W + 1)                      # flat span of the tap offsets
    margin = ((padf + 127) // 128) * 128      # lane-tile aligned zero margin
    wflat = HW + 2 * margin

    # Free reshape only -- no cast, no pad, no extra HBM pass over x.
    x_flat = x.reshape(N, Cin, HW)

    # (Cout, Cin*k*k) weight, columns ordered tap-major to match the stacked window.
    w_mat = (w.transpose(0, 2, 3, 1)
               .reshape(Cout, ksize * ksize * Cin)
               .astype(jnp.bfloat16))
    bias2d = bias.reshape(Cout, 1).astype(jnp.float32)

    # Column-validity masks (one row per kw offset), built once in the wrapper.
    col = jnp.arange(HW, dtype=jnp.int32) % W
    wmask = jnp.stack(
        [((col + (kw - pad) >= 0) & (col + (kw - pad) < W)).astype(jnp.float32)
         for kw in range(ksize)], axis=0)     # (ksize, HW) f32

    kernel = functools.partial(_same_conv_kernel, H=H, W=W, ksize=ksize,
                               pad=pad, margin=margin)
    return pl.pallas_call(
        kernel,
        out_shape=jax.ShapeDtypeStruct((N, Cout, HW), out_dtype),
        grid_spec=pltpu.PrefetchScalarGridSpec(
            num_scalar_prefetch=0,
            grid=(N,),
            in_specs=[
                pl.BlockSpec((1, Cin, HW), lambda n: (n, 0, 0)),
                pl.BlockSpec((Cout, ksize * ksize * Cin), lambda n: (0, 0)),
                pl.BlockSpec((ksize, HW), lambda n: (0, 0)),
                pl.BlockSpec((Cout, 1), lambda n: (0, 0)),
            ],
            out_specs=pl.BlockSpec((1, Cout, HW), lambda n: (n, 0, 0)),
            scratch_shapes=[
                pltpu.VMEM((Cin, wflat), jnp.float32),               # padded plane
                pltpu.VMEM((ksize * ksize * Cin, HW), jnp.float32),  # stacked windows
            ],
        ),
        compiler_params=pltpu.CompilerParams(
            dimension_semantics=("parallel",),
        ),
    )(x_flat, w_mat, wmask, bias2d)


# ---------------- general fallback: lane-dense transposed im2col matmul ----------------
# TODO(synk): this fallback (strided / 'valid' convs) still materializes the k*k-
# expanded patch tensor in HBM and ships the whole (Cin*k*k, Ho*Wo) plane per grid
# step; before using it on large images (esp. v7x's 64 MiB VMEM) it needs the same
# treatment as the fused path: in-kernel patch construction and (N, HW_tile[, K])
# grid tiling with an f32 accumulator.

def _im2col_mm_kernel(p_ref, w_ref, b_ref, o_ref):
    acc = jnp.dot(w_ref[...], p_ref[0], preferred_element_type=jnp.float32)
    acc = acc + b_ref[...]
    acc = jnp.where(acc >= 0.0, acc, 0.2 * acc)
    o_ref[0] = acc.astype(o_ref.dtype)


def conv_im2col(x, w, bias, *, ksize, stride, pad):
    """General (strided / 'valid') path: transposed im2col, spatial dim on lanes."""
    N, Cin, H, W = x.shape
    Cout = w.shape[0]
    xp = jnp.pad(x, ((0, 0), (0, 0), (pad, pad), (pad, pad))) if pad else x
    Hp, Wp = xp.shape[2], xp.shape[3]
    Ho = (Hp - ksize) // stride + 1
    Wo = (Wp - ksize) // stride + 1

    cols = []
    for kh in range(ksize):
        for kw in range(ksize):
            cols.append(xp[:, :, kh:kh + Ho * stride:stride,
                               kw:kw + Wo * stride:stride])   # (N,Cin,Ho,Wo)
    p = jnp.stack(cols, axis=0).reshape(ksize, ksize, N, Cin, Ho, Wo)
    # -> (N, Cin, kh, kw, Ho, Wo) -> (N, Cin*k*k, Ho*Wo)  [spatial dim last = lanes]
    p = p.transpose(2, 3, 0, 1, 4, 5).reshape(N, Cin * ksize * ksize, Ho * Wo)
    p = p.astype(jnp.bfloat16)
    w_mat = w.reshape(Cout, Cin * ksize * ksize).astype(jnp.bfloat16)
    bias2d = bias.reshape(Cout, 1).astype(jnp.float32)
    Kdim, HW = Cin * ksize * ksize, Ho * Wo

    out = pl.pallas_call(
        _im2col_mm_kernel,
        out_shape=jax.ShapeDtypeStruct((N, Cout, HW), jnp.float32),
        grid_spec=pltpu.PrefetchScalarGridSpec(
            num_scalar_prefetch=0,
            grid=(N,),
            in_specs=[
                pl.BlockSpec((1, Kdim, HW), lambda n: (n, 0, 0)),
                pl.BlockSpec((Cout, Kdim), lambda n: (0, 0)),
                pl.BlockSpec((Cout, 1), lambda n: (0, 0)),
            ],
            out_specs=pl.BlockSpec((1, Cout, HW), lambda n: (n, 0, 0)),
        ),
        compiler_params=pltpu.CompilerParams(
            dimension_semantics=("parallel",),
        ),
    )(p, w_mat, bias2d)
    return out, Ho, Wo


# ----------------------------- module wrapper --------------------------------

def conv2d_layer_forward(x, params, *, kernel_size, stride=1, padding=0):
    """Conv2dLayer(pad_type='zero', activation='lrelu', norm='none', sn=True), NCHW.

    Strided / even-kernel / 'valid' configs route to the slower im2col fallback;
    the fused path covers the stride=1, 'same' (2*pad == k-1) case."""
    # TODO(synk): reflect/replicate padding, dilation != 1 and the other
    # activation/norm options of Conv2dLayer are not implemented here.
    w_bar, bias, u, v = params["w_bar"], params["bias"], params["u"], params["v"]
    Cout = w_bar.shape[0]
    w = spectral_normalize(w_bar, u, v, power_iterations=1)   # f32

    N, _, H, W = x.shape
    if stride == 1 and 2 * padding == kernel_size - 1:
        out = conv_same_fused(x, w, bias, ksize=kernel_size, pad=padding)
        return out.reshape(N, Cout, H, W)
    out, Ho, Wo = conv_im2col(x, w, bias, ksize=kernel_size,
                              stride=stride, pad=padding)
    return out.reshape(N, Cout, Ho, Wo)


# ----------------------------- main ------------------------------------------

if __name__ == "__main__":
    # Conv2dLayer(in_channels=4, out_channels=8, kernel_size=3, padding=1)
    in_channels, out_channels, kernel_size, stride, padding = 4, 8, 3, 1, 1
    N, H, W = 2, 16, 16

    key = jax.random.PRNGKey(0)
    kx, kw, kb, ku, kv = jax.random.split(key, 5)

    x = jax.random.normal(kx, (N, in_channels, H, W), dtype=jnp.float32)
    w_bar = jax.random.normal(
        kw, (out_channels, in_channels, kernel_size, kernel_size),
        dtype=jnp.float32) * 0.1
    bias = jax.random.normal(kb, (out_channels,), dtype=jnp.float32) * 0.1
    u = l2normalize(jax.random.normal(ku, (out_channels,), dtype=jnp.float32))
    v = l2normalize(jax.random.normal(
        kv, (in_channels * kernel_size * kernel_size,), dtype=jnp.float32))
    params = {"w_bar": w_bar, "bias": bias, "u": u, "v": v}

    fwd = jax.jit(functools.partial(
        conv2d_layer_forward, kernel_size=kernel_size,
        stride=stride, padding=padding))
    out = fwd(x, params)
    jax.block_until_ready(out)

    # Reference: same spectrally-normalized weight, bf16 operands, f32 accumulation
    # (matches the kernel's numerics: the kernel's f32 pad/mask followed by a bf16
    # cast yields exactly the same bf16 patch values).
    w_sn = spectral_normalize(w_bar, u, v, 1)
    ref = jax.lax.conv_general_dilated(
        x.astype(jnp.bfloat16), w_sn.astype(jnp.bfloat16),
        window_strides=(stride, stride),
        padding=((padding, padding), (padding, padding)),
        dimension_numbers=("NCHW", "OIHW", "NCHW"),
        preferred_element_type=jnp.float32,
    ) + bias.reshape(1, -1, 1, 1)
    ref = jnp.where(ref >= 0, ref, 0.2 * ref)

    assert out.shape == (N, out_channels, H, W)
    assert jnp.allclose(out, ref, atol=5e-3, rtol=5e-3), float(
        jnp.max(jnp.abs(out - ref)))

    print("KERNEL_OK")
</pallas_src>

<mosaic_0001>
module attributes {stable_mosaic.version = 11 : i64} {
  func.func @_same_conv_kernel(%arg0: i32, %arg1: memref<1x4x256xf32, #tpu.memory_space<vmem>>, %arg2: memref<8x36xbf16, #tpu.memory_space<vmem>>, %arg3: memref<3x256xf32, #tpu.memory_space<vmem>>, %arg4: memref<8x1xf32, #tpu.memory_space<vmem>>, %arg5: memref<1x8x256xf32, #tpu.memory_space<vmem>>, %arg6: memref<4x512xf32, #tpu.memory_space<vmem>>, %arg7: memref<36x256xf32, #tpu.memory_space<vmem>>) attributes {dimension_semantics = [#tpu.dimension_semantics<parallel>], iteration_bounds = array<i64: 2>, scalar_prefetch = 0 : i64, scratch_operands = 2 : i64, tpu.core_type = #tpu.core_type<tc>, window_params = [{transform_indices = @transform_0, window_bounds = array<i64: 1, 4, 256>}, {pipeline_mode = #tpu.pipeline_mode<synchronous>, transform_indices = @transform_1, window_bounds = array<i64: 8, 36>}, {pipeline_mode = #tpu.pipeline_mode<synchronous>, transform_indices = @transform_2, window_bounds = array<i64: 3, 256>}, {pipeline_mode = #tpu.pipeline_mode<synchronous>, transform_indices = @transform_3, window_bounds = array<i64: 8, 1>}, {transform_indices = @transform_4, window_bounds = array<i64: 1, 8, 256>}]} {
    %cst = arith.constant 0.000000e+00 : f32
    %0 = vector.broadcast %cst : f32 to vector<4x512xf32>
    %c0 = arith.constant 0 : index
    %c0_0 = arith.constant 0 : index
    %1 = vector.load %arg6[%c0, %c0_0] : memref<4x512xf32, #tpu.memory_space<vmem>>, vector<4x512xf32>
    tpu.vector_store %arg6[%c0, %c0_0], %0 {strides = array<i32>} : memref<4x512xf32, #tpu.memory_space<vmem>>, vector<4x512xf32>,
    %c0_1 = arith.constant 0 : index
    %c0_2 = arith.constant 0 : index
    %c0_3 = arith.constant 0 : index
    %2 = vector.load %arg1[%c0_1, %c0_2, %c0_3] : memref<1x4x256xf32, #tpu.memory_space<vmem>>, vector<1x4x256xf32>
    %3 = vector.shape_cast %2 : vector<1x4x256xf32> to vector<4x256xf32>
    %c0_4 = arith.constant 0 : index
    %c128 = arith.constant 128 : index
    %4 = vector.load %arg6[%c0_4, %c128] : memref<4x512xf32, #tpu.memory_space<vmem>>, vector<4x256xf32>
    tpu.vector_store %arg6[%c0_4, %c128], %3 {strides = array<i32>} : memref<4x512xf32, #tpu.memory_space<vmem>>, vector<4x256xf32>,
    %c0_5 = arith.constant 0 : index
    %c111 = arith.constant 111 : index
    %5 = vector.load %arg6[%c0_5, %c111] : memref<4x512xf32, #tpu.memory_space<vmem>>, vector<4x256xf32>
    %c0_6 = arith.constant 0 : index
    %c0_7 = arith.constant 0 : index
    %6 = vector.load %arg3[%c0_6, %c0_7] : memref<3x256xf32, #tpu.memory_space<vmem>>, vector<1x256xf32>
    %7 = vector.broadcast %6 : vector<1x256xf32> to vector<4x256xf32>
    %8 = arith.mulf %5, %7 : vector<4x256xf32>
    %c0_8 = arith.constant 0 : index
    %c0_9 = arith.constant 0 : index
    %9 = vector.load %arg7[%c0_8, %c0_9] : memref<36x256xf32, #tpu.memory_space<vmem>>, vector<4x256xf32>
    tpu.vector_store %arg7[%c0_8, %c0_9], %8 {strides = array<i32>} : memref<36x256xf32, #tpu.memory_space<vmem>>, vector<4x256xf32>,
    %c0_10 = arith.constant 0 : index
    %c112 = arith.constant 112 : index
    %10 = vector.load %arg6[%c0_10, %c112] : memref<4x512xf32, #tpu.memory_space<vmem>>, vector<4x256xf32>
    %c4 = arith.constant 4 : index
    %c0_11 = arith.constant 0 : index
    %11 = vector.load %arg7[%c4, %c0_11] : memref<36x256xf32, #tpu.memory_space<vmem>>, vector<4x256xf32>
    tpu.vector_store %arg7[%c4, %c0_11], %10 {strides = array<i32>} : memref<36x256xf32, #tpu.memory_space<vmem>>, vector<4x256xf32>,
    %c0_12 = arith.constant 0 : index
    %c113 = arith.constant 113 : index
    %12 = vector.load %arg6[%c0_12, %c113] : memref<4x512xf32, #tpu.memory_space<vmem>>, vector<4x256xf32>
    %c2 = arith.constant 2 : index
    %c0_13 = arith.constant 0 : index
    %13 = vector.load %arg3[%c2, %c0_13] : memref<3x256xf32, #tpu.memory_space<vmem>>, vector<1x256xf32>
    %14 = vector.broadcast %13 : vector<1x256xf32> to vector<4x256xf32>
    %15 = arith.mulf %12, %14 : vector<4x256xf32>
    %c8 = arith.constant 8 : index
    %c0_14 = arith.constant 0 : index
    %16 = vector.load %arg7[%c8, %c0_14] : memref<36x256xf32, #tpu.memory_space<vmem>>, vector<4x256xf32>
    tpu.vector_store %arg7[%c8, %c0_14], %15 {strides = array<i32>} : memref<36x256xf32, #tpu.memory_space<vmem>>, vector<4x256xf32>,
    %c0_15 = arith.constant 0 : index
    %c127 = arith.constant 127 : index
    %17 = vector.load %arg6[%c0_15, %c127] : memref<4x512xf32, #tpu.memory_space<vmem>>, vector<4x256xf32>
    %c0_16 = arith.constant 0 : index
    %c0_17 = arith.constant 0 : index
    %18 = vector.load %arg3[%c0_16, %c0_17] : memref<3x256xf32, #tpu.memory_space<vmem>>, vector<1x256xf32>
    %19 = vector.broadcast %18 : vector<1x256xf32> to vector<4x256xf32>
    %20 = arith.mulf %17, %19 : vector<4x256xf32>
    %c12 = arith.constant 12 : index
    %c0_18 = arith.constant 0 : index
    %21 = vector.load %arg7[%c12, %c0_18] : memref<36x256xf32, #tpu.memory_space<vmem>>, vector<4x256xf32>
    tpu.vector_store %arg7[%c12, %c0_18], %20 {strides = array<i32>} : memref<36x256xf32, #tpu.memory_space<vmem>>, vector<4x256xf32>,
    %c0_19 = arith.constant 0 : index
    %c128_20 = arith.constant 128 : index
    %22 = vector.load %arg6[%c0_19, %c128_20] : memref<4x512xf32, #tpu.memory_space<vmem>>, vector<4x256xf32>
    %c16 = arith.constant 16 : index
    %c0_21 = arith.constant 0 : index
    %23 = vector.load %arg7[%c16, %c0_21] : memref<36x256xf32, #tpu.memory_space<vmem>>, vector<4x256xf32>
    tpu.vector_store %arg7[%c16, %c0_21], %22 {strides = array<i32>} : memref<36x256xf32, #tpu.memory_space<vmem>>, vector<4x256xf32>,
    %c0_22 = arith.constant 0 : index
    %c129 = arith.constant 129 : index
    %24 = vector.load %arg6[%c0_22, %c129] : memref<4x512xf32, #tpu.memory_space<vmem>>, vector<4x256xf32>
    %c2_23 = arith.constant 2 : index
    %c0_24 = arith.constant 0 : index
    %25 = vector.load %arg3[%c2_23, %c0_24] : memref<3x256xf32, #tpu.memory_space<vmem>>, vector<1x256xf32>
    %26 = vector.broadcast %25 : vector<1x256xf32> to vector<4x256xf32>
    %27 = arith.mulf %24, %26 : vector<4x256xf32>
    %c20 = arith.constant 20 : index
    %c0_25 = arith.constant 0 : index
    %28 = vector.load %arg7[%c20, %c0_25] : memref<36x256xf32, #tpu.memory_space<vmem>>, vector<4x256xf32>
    tpu.vector_store %arg7[%c20, %c0_25], %27 {strides = array<i32>} : memref<36x256xf32, #tpu.memory_space<vmem>>, vector<4x256xf32>,
    %c0_26 = arith.constant 0 : index
    %c143 = arith.constant 143 : index
    %29 = vector.load %arg6[%c0_26, %c143] : memref<4x512xf32, #tpu.memory_space<vmem>>, vector<4x256xf32>
    %c0_27 = arith.constant 0 : index
    %c0_28 = arith.constant 0 : index
    %30 = vector.load %arg3[%c0_27, %c0_28] : memref<3x256xf32, #tpu.memory_space<vmem>>, vector<1x256xf32>
    %31 = vector.broadcast %30 : vector<1x256xf32> to vector<4x256xf32>
    %32 = arith.mulf %29, %31 : vector<4x256xf32>
    %c24 = arith.constant 24 : index
    %c0_29 = arith.constant 0 : index
    %33 = vector.load %arg7[%c24, %c0_29] : memref<36x256xf32, #tpu.memory_space<vmem>>, vector<4x256xf32>
    tpu.vector_store %arg7[%c24, %c0_29], %32 {strides = array<i32>} : memref<36x256xf32, #tpu.memory_space<vmem>>, vector<4x256xf32>,
    %c0_30 = arith.constant 0 : index
    %c144 = arith.constant 144 : index
    %34 = vector.load %arg6[%c0_30, %c144] : memref<4x512xf32, #tpu.memory_space<vmem>>, vector<4x256xf32>
    %c28 = arith.constant 28 : index
    %c0_31 = arith.constant 0 : index
    %35 = vector.load %arg7[%c28, %c0_31] : memref<36x256xf32, #tpu.memory_space<vmem>>, vector<4x256xf32>
    tpu.vector_store %arg7[%c28, %c0_31], %34 {strides = array<i32>} : memref<36x256xf32, #tpu.memory_space<vmem>>, vector<4x256xf32>,
    %c0_32 = arith.constant 0 : index
    %c145 = arith.constant 145 : index
    %36 = vector.load %arg6[%c0_32, %c145] : memref<4x512xf32, #tpu.memory_space<vmem>>, vector<4x256xf32>
    %c2_33 = arith.constant 2 : index
    %c0_34 = arith.constant 0 : index
    %37 = vector.load %arg3[%c2_33, %c0_34] : memref<3x256xf32, #tpu.memory_space<vmem>>, vector<1x256xf32>
    %38 = vector.broadcast %37 : vector<1x256xf32> to vector<4x256xf32>
    %39 = arith.mulf %36, %38 : vector<4x256xf32>
    %c32 = arith.constant 32 : index
    %c0_35 = arith.constant 0 : index
    %40 = vector.load %arg7[%c32, %c0_35] : memref<36x256xf32, #tpu.memory_space<vmem>>, vector<4x256xf32>
    tpu.vector_store %arg7[%c32, %c0_35], %39 {strides = array<i32>} : memref<36x256xf32, #tpu.memory_space<vmem>>, vector<4x256xf32>,
    %c0_36 = arith.constant 0 : index
    %c0_37 = arith.constant 0 : index
    %41 = vector.load %arg2[%c0_36, %c0_37] : memref<8x36xbf16, #tpu.memory_space<vmem>>, vector<8x36xbf16>
    %c0_38 = arith.constant 0 : index
    %c0_39 = arith.constant 0 : index
    %42 = vector.load %arg7[%c0_38, %c0_39] : memref<36x256xf32, #tpu.memory_space<vmem>>, vector<36x256xf32>
    %43 = arith.truncf %42 : vector<36x256xf32> to vector<36x256xbf16>
    %cst_40 = arith.constant dense<0.000000e+00> : vector<8x256xf32>
    %44 = tpu.matmul %41, %43, %cst_40 {dimension_numbers = #tpu.dot_dimension_numbers<[1], [0], [0], [1], [0, 0, 1, 1], [], []>} : vector<8x36xbf16>, vector<36x256xbf16>, vector<8x256xf32> -> vector<8x256xf32>
    %c0_41 = arith.constant 0 : index
    %c0_42 = arith.constant 0 : index
    %45 = vector.load %arg4[%c0_41, %c0_42] : memref<8x1xf32, #tpu.memory_space<vmem>>, vector<8x1xf32>
    %46 = vector.broadcast %45 : vector<8x1xf32> to vector<8x256xf32>
    %47 = arith.addf %44, %46 : vector<8x256xf32>
    %cst_43 = arith.constant 0.000000e+00 : f32
    %48 = vector.broadcast %cst_43 : f32 to vector<8x256xf32>
    %49 = arith.cmpf oge, %47, %48 : vector<8x256xf32>
    %cst_44 = arith.constant 2.000000e-01 : f32
    %50 = vector.broadcast %cst_44 : f32 to vector<8x256xf32>
    %51 = arith.mulf %50, %47 : vector<8x256xf32>
    %52 = arith.select %49, %47, %51 : vector<8x256xi1>, vector<8x256xf32>
    %c0_45 = arith.constant 0 : index
    %c0_46 = arith.constant 0 : index
    %c0_47 = arith.constant 0 : index
    %53 = vector.load %arg5[%c0_45, %c0_46, %c0_47] : memref<1x8x256xf32, #tpu.memory_space<vmem>>, vector<1x8x256xf32>
    %54 = vector.shape_cast %53 : vector<1x8x256xf32> to vector<8x256xf32>
    %55 = vector.shape_cast %52 : vector<8x256xf32> to vector<1x8x256xf32>
    tpu.vector_store %arg5[%c0_45, %c0_46, %c0_47], %55 {strides = array<i32>} : memref<1x8x256xf32, #tpu.memory_space<vmem>>, vector<1x8x256xf32>,
    return
  }
  func.func @transform_0(%arg0: i32) -> (i32, i32, i32) {
    %c0_i32 = arith.constant 0 : i32
    %c0_i32_0 = arith.constant 0 : i32
    %c0_i32_1 = arith.constant 0 : i32
    return %arg0, %c0_i32, %c0_i32_0 : i32, i32, i32
  }
  func.func @transform_1(%arg0: i32) -> (i32, i32) {
    %c0_i32 = arith.constant 0 : i32
    %c0_i32_0 = arith.constant 0 : i32
    %c0_i32_1 = arith.constant 0 : i32
    return %c0_i32, %c0_i32_0 : i32, i32
  }
  func.func @transform_2(%arg0: i32) -> (i32, i32) {
    %c0_i32 = arith.constant 0 : i32
    %c0_i32_0 = arith.constant 0 : i32
    %c0_i32_1 = arith.constant 0 : i32
    return %c0_i32, %c0_i32_0 : i32, i32
  }
  func.func @transform_3(%arg0: i32) -> (i32, i32) {
    %c0_i32 = arith.constant 0 : i32
    %c0_i32_0 = arith.constant 0 : i32
    %c0_i32_1 = arith.constant 0 : i32
    return %c0_i32, %c0_i32_0 : i32, i32
  }
  func.func @transform_4(%arg0: i32) -> (i32, i32, i32) {
    %c0_i32 = arith.constant 0 : i32
    %c0_i32_0 = arith.constant 0 : i32
    %c0_i32_1 = arith.constant 0 : i32
    return %arg0, %c0_i32, %c0_i32_0 : i32, i32, i32
  }
}

</mosaic_0001>

<llo_original>
// kernel: conv2d_layer_forward.1
$region0: #{conv2d_layer_forward.1}
  #allocation0 [shape = 'u32[]', space=smem, size = 0x4, offset = 0x4, fixed_abs, tag = 'smem constant byte address 0x4 - core index']
  #allocation1 [shape = 'u32[72,128]{1,0:T(1,128)}', space=vmem, size = 0x9000, scoped, tag = 'internal scratch']
  #allocation2 [shape = 'f32[4,512]{1,0:T(4,128)}', space=vmem, size = 0x2000, scoped, tag = 'scratch operand']
  #allocation3 [shape = 'f32[36,256]{1,0:T(8,128)}', space=vmem, size = 0xa000, scoped, tag = 'scratch operand']
  %s0 = inlined_call_operand.vmem [shape: f32[2,4,256], index: 0, kind: input, shape index: {}]
  %s1 = inlined_call_operand.vmem [shape: bf16[8,36], index: 1, kind: input, shape index: {}]
  %s2 = inlined_call_operand.vmem [shape: f32[3,256], index: 2, kind: input, shape index: {}]
  %s3 = inlined_call_operand.vmem [shape: f32[8,1], index: 3, kind: input, shape index: {}]
  %s4 = inlined_call_operand.vmem [shape: f32[2,8,256], index: 4, kind: output, shape index: {}]
  %s5 = sld [smem:[#allocation0]]
  $region49: #{conv2d_layer_forward.1} parent=0
    _
  %s7 = ssub.s32 1, %s5
  %s8 = scalar_select 0, %s7, %s5
  loop: start=0, step=1, limit=4
  $region2: #{conv2d_layer_forward.1} parent=0 // loop_pre_header
    _
  $region3: #{conv2d_layer_forward.1} parent=0 // loop_header
    %s10 = sphi 0, %s14
    %p11 = scmp.ge.s32.totalorder %s10, 4
    %s20 = sphi 0, %s22
    %s23 = sphi 0, %s20
    %s24 = sphi 0, %s23
    %s40 = sphi 0, %s24
    %s44 = sphi 0, %s44
    %s46 = sphi 0, %s44
    %s47 = sphi 0, %s46
    %s61 = sphi 0, %s47
    %s65 = sphi 0, %s65
    %s67 = sphi 0, %s65
    %s68 = sphi 0, %s67
    %s82 = sphi 0, %s68
    %s86 = sphi 0, %s86
    %s88 = sphi 0, %s86
    %s89 = sphi 0, %s88
    %s103 = sphi 0, %s89
    %s109 = sphi 0, %s111
    %s112 = sphi 0, %s109
    %s113 = sphi 0, %s112
    %s129 = sphi 0, %s113
  $region4: #{conv2d_layer_forward.1} parent=0 // loop_header_branch
    %13 = sbr.rel (%p11) target = $region8
  $region5: #{conv2d_layer_forward.1} parent=0 // loop_body
    %s15 = ssub.s32 %s10, 1
    %s16 = ssub.s32 %s10, 2
    %s17 = sadd.s32 %s10, 1
    %s18 = ssub.s32 %s10, %s17
    %p19 = scmp.eq.s32.totalorder %s18, 0
    %s21 = sadd.s32 %s20, 1
    %s22 = scalar_select %p19, %s20, %s21
    %p25 = pneg %p19
    %p26 = scmp.eq.s32.totalorder %s10, 1
    %p27 = por %p25, %p26
    %p28 = scmp.ne.s32.totalorder %s20, %s23
    %p29 = scmp.eq.s32.totalorder %s10, 0
    %p30 = por %p28, %p29
    %p31 = scmp.ne.s32.totalorder %s20, %s23
    %p32 = scmp.eq.s32.totalorder %s15, 1
    %p33 = por %p31, %p32
    %p34 = scmp.ne.s32.totalorder %s23, %s24
    %p35 = scmp.eq.s32.totalorder %s15, 0
    %p36 = por %p34, %p35
    %p37 = scmp.ne.s32.totalorder %s23, %s24
    %p38 = scmp.eq.s32.totalorder %s16, 1
    %p39 = por %p37, %p38
    %p41 = scmp.ne.s32.totalorder %s24, %s40
    %p42 = scmp.eq.s32.totalorder %s16, 0
    %p43 = por %p41, %p42
    %s45 = sadd.s32 %s44, 1
    %p48 = scmp.eq.s32.totalorder %s10, 1
    %p49 = scmp.ne.s32.totalorder %s44, %s46
    %p50 = scmp.eq.s32.totalorder %s10, 0
    %p51 = por %p49, %p50
    %p52 = scmp.ne.s32.totalorder %s44, %s46
    %p53 = scmp.eq.s32.totalorder %s15, 1
    %p54 = por %p52, %p53
    %p55 = scmp.ne.s32.totalorder %s46, %s47
    %p56 = scmp.eq.s32.totalorder %s15, 0
    %p57 = por %p55, %p56
    %p58 = scmp.ne.s32.totalorder %s46, %s47
    %p59 = scmp.eq.s32.totalorder %s16, 1
    %p60 = por %p58, %p59
    %p62 = scmp.ne.s32.totalorder %s47, %s61
    %p63 = scmp.eq.s32.totalorder %s16, 0
    %p64 = por %p62, %p63
    %s66 = sadd.s32 %s65, 1
    %p69 = scmp.eq.s32.totalorder %s10, 1
    %p70 = scmp.ne.s32.totalorder %s65, %s67
    %p71 = scmp.eq.s32.totalorder %s10, 0
    %p72 = por %p70, %p71
    %p73 = scmp.ne.s32.totalorder %s65, %s67
    %p74 = scmp.eq.s32.totalorder %s15, 1
    %p75 = por %p73, %p74
    %p76 = scmp.ne.s32.totalorder %s67, %s68
    %p77 = scmp.eq.s32.totalorder %s15, 0
    %p78 = por %p76, %p77
    %p79 = scmp.ne.s32.totalorder %s67, %s68
    %p80 = scmp.eq.s32.totalorder %s16, 1
    %p81 = por %p79, %p80
    %p83 = scmp.ne.s32.totalorder %s68, %s82
    %p84 = scmp.eq.s32.totalorder %s16, 0
    %p85 = por %p83, %p84
    %s87 = sadd.s32 %s86, 1
    %p90 = scmp.eq.s32.totalorder %s10, 1
    %p91 = scmp.ne.s32.totalorder %s86, %s88
    %p92 = scmp.eq.s32.totalorder %s10, 0
    %p93 = por %p91, %p92
    %p94 = scmp.ne.s32.totalorder %s86, %s88
    %p95 = scmp.eq.s32.totalorder %s15, 1
    %p96 = por %p94, %p95
    %p97 = scmp.ne.s32.totalorder %s88, %s89
    %p98 = scmp.eq.s32.totalorder %s15, 0
    %p99 = por %p97, %p98
    %p100 = scmp.ne.s32.totalorder %s88, %s89
    %p101 = scmp.eq.s32.totalorder %s16, 1
    %p102 = por %p100, %p101
    %p104 = scmp.ne.s32.totalorder %s89, %s103
    %p105 = scmp.eq.s32.totalorder %s16, 0
    %p106 = por %p104, %p105
    %s107 = ssub.s32 %s10, %s17
    %p108 = scmp.eq.s32.totalorder %s107, 0
    %s110 = sadd.s32 %s109, 1
    %s111 = scalar_select %p108, %s109, %s110
    %p114 = pneg %p108
    %p115 = scmp.eq.s32.totalorder %s10, 1
    %p116 = por %p114, %p115
    %p117 = scmp.ne.s32.totalorder %s109, %s112
    %p118 = scmp.eq.s32.totalorder %s10, 0
    %p119 = por %p117, %p118
    %p120 = scmp.ne.s32.totalorder %s109, %s112
    %p121 = scmp.eq.s32.totalorder %s15, 1
    %p122 = por %p120, %p121
    %p123 = scmp.ne.s32.totalorder %s112, %s113
    %p124 = scmp.eq.s32.totalorder %s15, 0
    %p125 = por %p123, %p124
    %p126 = scmp.ne.s32.totalorder %s112, %s113
    %p127 = scmp.eq.s32.totalorder %s16, 1
    %p128 = por %p126, %p127
    %p130 = scmp.ne.s32.totalorder %s113, %s129
    %p131 = scmp.eq.s32.totalorder %s16, 0
    %p132 = por %p130, %p131
    %p133 = scmp.le.s32.totalorder 1, %s10
    %p134 = scmp.lt.s32.totalorder %s10, 3
    %p135 = pnand %p133, %p134
    %p136 = pneg %p135
    // Predicated region
    $region9: #{conv2d_layer_forward.1} parent=5 // pred_check
      _
    $region10: #{conv2d_layer_forward.1} parent=5 // pred_check_branch
      %138 = sbr.rel (%p135) target = $region12
    $region11: #{conv2d_layer_forward.1} parent=5 // pred_region
      %s139 = ssub.s32 %s10, 1
      // Predicated region
      $region13: #{conv2d_layer_forward.1} parent=11 // pred_check
        %p140 = pneg %p57
      $region14: #{conv2d_layer_forward.1} parent=11 // pred_check_branch
        %142 = sbr.rel (%p140) target = $region16
      $region15: #{conv2d_layer_forward.1} parent=11 // pred_region
        _
      $region16: #{conv2d_layer_forward.1} parent=11 // pred_fallthru
        _
      // Predicated region
      $region17: #{conv2d_layer_forward.1} parent=11 // pred_check
        %p143 = pneg %p78
      $region18: #{conv2d_layer_forward.1} parent=11 // pred_check_branch
        %145 = sbr.rel (%p143) target = $region20
      $region19: #{conv2d_layer_forward.1} parent=11 // pred_region
        _
      $region20: #{conv2d_layer_forward.1} parent=11 // pred_fallthru
        _
      // Predicated region
      $region21: #{conv2d_layer_forward.1} parent=11 // pred_check
        %p146 = pneg %p99
      $region22: #{conv2d_layer_forward.1} parent=11 // pred_check_branch
        %148 = sbr.rel (%p146) target = $region24
      $region23: #{conv2d_layer_forward.1} parent=11 // pred_region
        _
      $region24: #{conv2d_layer_forward.1} parent=11 // pred_fallthru
        _
    $region12: #{conv2d_layer_forward.1} parent=5 // pred_fallthru
      _
    %p149 = scmp.lt.s32.totalorder %s10, 2
    // Predicated region
    $region25: #{conv2d_layer_forward.1} parent=5 // pred_check
      %p150 = pneg %p149
    $region26: #{conv2d_layer_forward.1} parent=5 // pred_check_branch
      %152 = sbr.rel (%p150) target = $region28
    $region27: #{conv2d_layer_forward.1} parent=5 // pred_region
      // Predicated region
      $region29: #{conv2d_layer_forward.1} parent=27 // pred_check
        %p153 = pneg %p30
      $region30: #{conv2d_layer_forward.1} parent=27 // pred_check_branch
        %155 = sbr.rel (%p153) target = $region32
      $region31: #{conv2d_layer_forward.1} parent=27 // pred_region
        %p156 = scmp.lt.s32.totalorder %s10, 1
        %s157 = scalar_select %p156, %s10, 1
        %s158 = smul.addr %s157, 2
        %s159 = smul.addr %s158, 4
        %s160 = scalar_lea.vmem %s0, %s159
      $region32: #{conv2d_layer_forward.1} parent=27 // pred_fallthru
        _
    $region28: #{conv2d_layer_forward.1} parent=5 // pred_fallthru
      _
    %p161 = scmp.le.s32.totalorder 1, %s10
    %p162 = scmp.lt.s32.totalorder %s10, 3
    %p163 = pnand %p161, %p162
    %p164 = pneg %p163
    // Predicated region
    $region33: #{conv2d_layer_forward.1} parent=5 // pred_check
      _
    $region34: #{conv2d_layer_forward.1} parent=5 // pred_check_branch
      %166 = sbr.rel (%p163) target = $region36
    $region35: #{conv2d_layer_forward.1} parent=5 // pred_region
      %s167 = ssub.s32 %s10, 1
      %p168 = scmp.lt.s32.totalorder %s15, 1
      %s169 = scalar_select %p168, %s15, 1
      %s170 = smul.addr %s169, 2
      %s171 = smul.addr %s170, 4
      %s172 = scalar_lea.vmem %s0, %s171
      %p173 = pneg %p36
      %p174 = pneg %p33
      %p175 = pneg %p57
      %p176 = pneg %p54
      %p177 = pneg %p78
      %p178 = pneg %p75
      %p179 = pneg %p99
      %p180 = pneg %p96
      %p181 = pneg %p125
      %p182 = pneg %p122
      %p183 = scmp.lt.s32.totalorder %s15, 1
      %s184 = scalar_select %p183, %s15, 1
      %s185 = smul.addr %s184, 2
      %s186 = smul.addr %s185, 8
      %s187 = scalar_lea.vmem %s4, %s186
      %p188 = scmp.lt.s32.totalorder %s15, 1
      %s189 = scalar_select %p188, %s15, 1
      %s190 = smul.addr %s189, 2
      %s191 = smul.addr %s190, 4
      %s192 = scalar_lea.vmem %s0, %s191
      %p193 = scmp.lt.s32.totalorder %s15, 1
      %s194 = scalar_select %p193, %s15, 1
      %s195 = smul.addr %s194, 2
      %s196 = smul.addr %s195, 8
      %s197 = scalar_lea.vmem %s4, %s196
      %199 = vst [vmem:[#allocation2] sm:$0xff] 0.0
      %200 = vst [vmem:[#allocation2 + $0x8] sm:$0xff] 0.0
      %v201 = vld [vmem:[%s192] sm:$0xff]
      %202 = vst [vmem:[#allocation2 + $0x4] sm:$0xff] %v201
      %v203 = vld [vmem:[#allocation2] sm:$0xff]
      %v204 = vld [vmem:[#allocation2 + $0x8] sm:$0xf]
      %v205 = vld [vmem:[%s2] ss:$4 sm:$0x3]
      %v207 = vperm.slane %v205, 0
      %v208 = vperm.slane %v205, 1
      %v209 = vrot.slane %v208, 4
      %vm210 = vcmask 1043456
      %v211 = vsel %vm210, %v207, %v209
      %212 = vrot.lane.b32.xlu0 %v211, 111
      %v213 = vpop.permute.xlu0 %212
      %v214 = vrot.slane %v213, 4
      %vm215 = vcmask 908288
      %v216 = vsel %vm215, %v214, %v213
      %v219 = vmul.f32 %v203, %v216
      %v220 = vmul.f32 %v204, %v214
      %223 = vst [vmem:[#allocation1] ss:$2 sm:$0xff] %v219
      %s224 = scalar_lea.vmem [#allocation1], 16
      %225 = vst [vmem:[%s224] ss:$2 sm:$0xff] %v220
      %v226 = vld.sshfl [vmem:[#allocation1] sm:$0xff pattern:$0x75316420]
      %v227 = vld.sshfl [vmem:[#allocation1 + $0x8] sm:$0xff pattern:$0x75316420]
      %v228 = vld.sshfl [vmem:[#allocation1 + $0x10] sm:$0xff pattern:$0x75316420]
      %229 = vrot.lane.b32.xlu0 %v226, 17
      %v230 = vpop.permute.xlu0 %229
      %231 = vrot.lane.b32.xlu0 %v227, 17
      %v232 = vpop.permute.xlu0 %231
      %233 = vrot.lane.b32.xlu0 %v228, 17
      %v234 = vpop.permute.xlu0 %233
      %vm235 = vcmask 138240
      %v236 = vsel %vm235, %v230, %v232
      %v237 = vsel %vm235, %v232, %v234
      %240 = vst [vmem:[#allocation3] sm:$0xf] %v236
      %241 = vst [vmem:[#allocation3 + $0x8] sm:$0xf] %v237
      %v242 = vld [vmem:[#allocation2] sm:$0xff]
      %v243 = vld [vmem:[#allocation2 + $0x8] sm:$0xf]
      %s246 = scalar_lea.vmem [#allocation1], 1
      %247 = vst [vmem:[%s246] ss:$2 sm:$0xff] %v242
      %s248 = scalar_lea.vmem [#allocation1], 17
      %249 = vst [vmem:[%s248] ss:$2 sm:$0xff] %v243
      %v250 = vld.sshfl [vmem:[#allocation1] sm:$0xff pattern:$0x75316420]
      %v251 = vld.sshfl [vmem:[#allocation1 + $0x8] sm:$0xff pattern:$0x75316420]
      %v252 = vld.sshfl [vmem:[#allocation1 + $0x10] sm:$0xff pattern:$0x75316420]
      %253 = vrot.lane.b32.xlu0 %v250, 16
      %v254 = vpop.permute.xlu0 %253
      %255 = vrot.lane.b32.xlu0 %v251, 16
      %v256 = vpop.permute.xlu0 %255
      %257 = vrot.lane.b32.xlu0 %v252, 16
      %v258 = vpop.permute.xlu0 %257
      %vm259 = vcmask 130048
      %v260 = vsel %vm259, %v254, %v256
      %v261 = vsel %vm259, %v256, %v258
      %264 = vst [vmem:[#allocation3] sm:$0xf0] %v260
      %265 = vst [vmem:[#allocation3 + $0x8] sm:$0xf0] %v261
      %v266 = vld [vmem:[#allocation2] sm:$0xff]
      %v267 = vld [vmem:[#allocation2 + $0x8] sm:$0xf]
      %s268 = scalar_lea.vmem %s2, 2
      %v269 = vld [vmem:[%s268] ss:$4 sm:$0x3]
      %v271 = vperm.slane %v269, 0
      %v272 = vperm.slane %v269, 1
      %v273 = vrot.slane %v272, 4
      %v274 = vsel %vm210, %v271, %v273
      %275 = vrot.lane.b32.xlu0 %v274, 113
      %v276 = vpop.permute.xlu0 %275
      %v277 = vrot.slane %v276, 4
      %vm278 = vcmask 924672
      %v279 = vsel %vm278, %v277, %v276
      %v282 = vmul.f32 %v266, %v279
      %v283 = vmul.f32 %v267, %v277
      %286 = vst [vmem:[#allocation1] ss:$2 sm:$0xff] %v282
      %s287 = scalar_lea.vmem [#allocation1], 16
      %288 = vst [vmem:[%s287] ss:$2 sm:$0xff] %v283
      %v289 = vld.sshfl [vmem:[#allocation1] sm:$0xff pattern:$0x75316420]
      %v290 = vld.sshfl [vmem:[#allocation1 + $0x8] sm:$0xff pattern:$0x75316420]
      %v291 = vld.sshfl [vmem:[#allocation1 + $0x10] sm:$0xff pattern:$0x75316420]
      %292 = vrot.lane.b32.xlu0 %v289, 15
      %v293 = vpop.permute.xlu0 %292
      %294 = vrot.lane.b32.xlu0 %v290, 15
      %v295 = vpop.permute.xlu0 %294
      %296 = vrot.lane.b32.xlu0 %v291, 15
      %v297 = vpop.permute.xlu0 %296
      %vm298 = vcmask 121856
      %v299 = vsel %vm298, %v293, %v295
      %v300 = vsel %vm298, %v295, %v297
      %303 = vst [vmem:[#allocation3 + $0x10] sm:$0xf] %v299
      %304 = vst [vmem:[#allocation3 + $0x18] sm:$0xf] %v300
      %v305 = vld [vmem:[#allocation2] sm:$0xff]
      %v306 = vld [vmem:[#allocation2 + $0x8] sm:$0xf]
      %v307 = vld [vmem:[%s2] ss:$4 sm:$0x3]
      %v309 = vperm.slane %v307, 0
      %v310 = vperm.slane %v307, 1
      %v311 = vrot.slane %v310, 4
      %v312 = vsel %vm210, %v309, %v311
      %313 = vrot.lane.b32.xlu0 %v312, 127
      %v314 = vpop.permute.xlu0 %313
      %v315 = vrot.slane %v314, 4
      %vm316 = vcmask 1039360
      %v317 = vsel %vm316, %v315, %v314
      %v320 = vmul.f32 %v305, %v317
      %v321 = vmul.f32 %v306, %v315
      %s324 = scalar_lea.vmem [#allocation1], 1
      %325 = vst [vmem:[%s324] ss:$2 sm:$0xff] %v320
      %s326 = scalar_lea.vmem [#allocation1], 17
      %327 = vst [vmem:[%s326] ss:$2 sm:$0xff] %v321
      %v328 = vld.sshfl [vmem:[#allocation1] sm:$0xff pattern:$0x75316420]
      %v329 = vld.sshfl [vmem:[#allocation1 + $0x8] sm:$0xff pattern:$0x75316420]
      %v330 = vld.sshfl [vmem:[#allocation1 + $0x10] sm:$0xff pattern:$0x75316420]
      %331 = vrot.lane.b32.xlu0 %v328, 1
      %v332 = vpop.permute.xlu0 %331
      %333 = vrot.lane.b32.xlu0 %v329, 1
      %v334 = vpop.permute.xlu0 %333
      %335 = vrot.lane.b32.xlu0 %v330, 1
      %v336 = vpop.permute.xlu0 %335
      %vm337 = vcmask 7168
      %v338 = vsel %vm337, %v332, %v334
      %v339 = vsel %vm337, %v334, %v336
      %342 = vst [vmem:[#allocation3 + $0x10] sm:$0xf0] %v338
      %343 = vst [vmem:[#allocation3 + $0x18] sm:$0xf0] %v339
      %v344 = vld [vmem:[#allocation2 + $0x4] sm:$0xff]
      %346 = vst [vmem:[#allocation1] ss:$2 sm:$0xff] %v344
      %v347 = vld.sshfl [vmem:[#allocation1] sm:$0xff pattern:$0x75316420]
      %v348 = vld.sshfl [vmem:[#allocation1 + $0x8] sm:$0xff pattern:$0x75316420]
      %351 = vst [vmem:[#allocation3 + $0x20] sm:$0xf] %v347
      %352 = vst [vmem:[#allocation3 + $0x28] sm:$0xf] %v348
      %v353 = vld [vmem:[#allocation2 + $0x4] sm:$0xff]
      %v354 = vld [vmem:[#allocation2 + $0xc] sm:$0xf]
      %v355 = vld [vmem:[%s268] ss:$4 sm:$0x3]
      %v357 = vperm.slane %v355, 0
      %v358 = vperm.slane %v355, 1
      %v359 = vrot.slane %v358, 4
      %v360 = vsel %vm210, %v357, %v359
      %361 = vrot.lane.b32.xlu0 %v360, 1
      %v362 = vpop.permute.xlu0 %361
      %v363 = vrot.slane %v362, 4
      %v364 = vsel %vm337, %v363, %v362
      %v367 = vmul.f32 %v353, %v364
      %v368 = vmul.f32 %v354, %v363
      %s371 = scalar_lea.vmem [#allocation1], 1
      %372 = vst [vmem:[%s371] ss:$2 sm:$0xff] %v367
      %s373 = scalar_lea.vmem [#allocation1], 17
      %374 = vst [vmem:[%s373] ss:$2 sm:$0xff] %v368
      %v375 = vld.sshfl [vmem:[#allocation1] sm:$0xff pattern:$0x75316420]
      %v376 = vld.sshfl [vmem:[#allocation1 + $0x8] sm:$0xff pattern:$0x75316420]
      %v377 = vld.sshfl [vmem:[#allocation1 + $0x10] sm:$0xff pattern:$0x75316420]
      %378 = vrot.lane.b32.xlu0 %v375, 127
      %v379 = vpop.permute.xlu0 %378
      %380 = vrot.lane.b32.xlu0 %v376, 127
      %v381 = vpop.permute.xlu0 %380
      %382 = vrot.lane.b32.xlu0 %v377, 127
      %v383 = vpop.permute.xlu0 %382
      %v384 = vsel %vm316, %v379, %v381
      %v385 = vsel %vm316, %v381, %v383
      %388 = vst [vmem:[#allocation3 + $0x20] sm:$0xf0] %v384
      %389 = vst [vmem:[#allocation3 + $0x28] sm:$0xf0] %v385
      %v390 = vld [vmem:[#allocation2 + $0x4] sm:$0xff]
      %v391 = vld [vmem:[#allocation2 + $0xc] sm:$0xf]
      %v392 = vld [vmem:[%s2] ss:$4 sm:$0x3]
      %v394 = vperm.slane %v392, 0
      %v395 = vperm.slane %v392, 1
      %v396 = vrot.slane %v395, 4
      %v397 = vsel %vm210, %v394, %v396
      %398 = vrot.lane.b32.xlu0 %v397, 15
      %v399 = vpop.permute.xlu0 %398
      %v400 = vrot.slane %v399, 4
      %v401 = vsel %vm298, %v400, %v399
      %v404 = vmul.f32 %v390, %v401
      %v405 = vmul.f32 %v391, %v400
      %408 = vst [vmem:[#allocation1] ss:$2 sm:$0xff] %v404
      %s409 = scalar_lea.vmem [#allocation1], 16
      %410 = vst [vmem:[%s409] ss:$2 sm:$0xff] %v405
      %v411 = vld.sshfl [vmem:[#allocation1] sm:$0xff pattern:$0x75316420]
      %v412 = vld.sshfl [vmem:[#allocation1 + $0x8] sm:$0xff pattern:$0x75316420]
      %v413 = vld.sshfl [vmem:[#allocation1 + $0x10] sm:$0xff pattern:$0x75316420]
      %414 = vrot.lane.b32.xlu0 %v411, 113
      %v415 = vpop.permute.xlu0 %414
      %416 = vrot.lane.b32.xlu0 %v412, 113
      %v417 = vpop.permute.xlu0 %416
      %418 = vrot.lane.b32.xlu0 %v413, 113
      %v419 = vpop.permute.xlu0 %418
      %v420 = vsel %vm278, %v415, %v417
      %v421 = vsel %vm278, %v417, %v419
      %424 = vst [vmem:[#allocation3 + $0x30] sm:$0xf] %v420
      %425 = vst [vmem:[#allocation3 + $0x38] sm:$0xf] %v421
      %v426 = vld [vmem:[#allocation2 + $0x4] sm:$0xff]
      %v427 = vld [vmem:[#allocation2 + $0xc] sm:$0xf]
      %s430 = scalar_lea.vmem [#allocation1], 1
      %431 = vst [vmem:[%s430] ss:$2 sm:$0xff] %v426
      %s432 = scalar_lea.vmem [#allocation1], 17
      %433 = vst [vmem:[%s432] ss:$2 sm:$0xff] %v427
      %v434 = vld.sshfl [vmem:[#allocation1] sm:$0xff pattern:$0x75316420]
      %v435 = vld.sshfl [vmem:[#allocation1 + $0x8] sm:$0xff pattern:$0x75316420]
      %v436 = vld.sshfl [vmem:[#allocation1 + $0x10] sm:$0xff pattern:$0x75316420]
      %437 = vrot.lane.b32.xlu0 %v434, 112
      %v438 = vpop.permute.xlu0 %437
      %439 = vrot.lane.b32.xlu0 %v435, 112
      %v440 = vpop.permute.xlu0 %439
      %441 = vrot.lane.b32.xlu0 %v436, 112
      %v442 = vpop.permute.xlu0 %441
      %vm443 = vcmask 916480
      %v444 = vsel %vm443, %v438, %v440
      %v445 = vsel %vm443, %v440, %v442
      %448 = vst [vmem:[#allocation3 + $0x30] sm:$0xf0] %v444
      %449 = vst [vmem:[#allocation3 + $0x38] sm:$0xf0] %v445
      %v450 = vld [vmem:[#allocation2 + $0x4] sm:$0xff]
      %v451 = vld [vmem:[#allocation2 + $0xc] sm:$0xf]
      %v452 = vld [vmem:[%s268] ss:$4 sm:$0x3]
      %v454 = vperm.slane %v452, 0
      %v455 = vperm.slane %v452, 1
      %v456 = vrot.slane %v455, 4
      %v457 = vsel %vm210, %v454, %v456
      %458 = vrot.lane.b32.xlu0 %v457, 17
      %v459 = vpop.permute.xlu0 %458
      %v460 = vrot.slane %v459, 4
      %v461 = vsel %vm235, %v460, %v459
      %v464 = vmul.f32 %v450, %v461
      %v465 = vmul.f32 %v451, %v460
      %468 = vst [vmem:[#allocation1] ss:$2 sm:$0xff] %v464
      %s469 = scalar_lea.vmem [#allocation1], 16
      %470 = vst [vmem:[%s469] ss:$2 sm:$0xff] %v465
      %v471 = vld.sshfl [vmem:[#allocation1] sm:$0xff pattern:$0x75316420]
      %v472 = vld.sshfl [vmem:[#allocation1 + $0x8] sm:$0xff pattern:$0x75316420]
      %v473 = vld.sshfl [vmem:[#allocation1 + $0x10] sm:$0xff pattern:$0x75316420]
      %474 = vrot.lane.b32.xlu0 %v471, 111
      %v475 = vpop.permute.xlu0 %474
      %476 = vrot.lane.b32.xlu0 %v472, 111
      %v477 = vpop.permute.xlu0 %476
      %478 = vrot.lane.b32.xlu0 %v473, 111
      %v479 = vpop.permute.xlu0 %478
      %v480 = vsel %vm215, %v475, %v477
      %v481 = vsel %vm215, %v477, %v479
      %484 = vst [vmem:[#allocation3 + $0x40] sm:$0xf] %v480
      %485 = vst [vmem:[#allocation3 + $0x48] sm:$0xf] %v481
      %v486 = vld [vmem:[%s1] sm:$0xf]
      %v487 = vld [vmem:[#allocation3] sm:$0xff]
      %v488 = vld [vmem:[#allocation3 + $0x8] sm:$0xff]
      %v489 = vld [vmem:[#allocation3 + $0x10] sm:$0xff]
      %v490 = vld [vmem:[#allocation3 + $0x18] sm:$0xff]
      %v491 = vld [vmem:[#allocation3 + $0x20] sm:$0xff]
      %v492 = vld [vmem:[#allocation3 + $0x28] sm:$0xff]
      %v493 = vld [vmem:[#allocation3 + $0x30] sm:$0xff]
      %v494 = vld [vmem:[#allocation3 + $0x38] sm:$0xff]
      %v495 = vld [vmem:[#allocation3 + $0x40] sm:$0xf]
      %v496 = vld [vmem:[#allocation3 + $0x48] sm:$0xf]
      %v497 = vpack.c.bf16 %v489, %v487
      %v498 = vpack.c.bf16 %v490, %v488
      %v499 = vpack.c.bf16 %v493, %v491
      %v500 = vpack.c.bf16 %v494, %v492
      %v501 = vpack.c.bf16 %v495, %v495
      %v502 = vpack.c.bf16 %v496, %v496
      %v503 = vld [vmem:[%s3] sm:$0xff]
      %505 = vset.pattern.permute.xlu0 0
      %506 = vperm.xlu0 %505, %v503
      %v507 = vpop.permute.xlu0 %506
      %vm509 = vcmask 293888
      %v511 = vsel %vm509, %v486, 0
      %vm513 = vcmask 1041408
      %v515 = vsel %vm513, %v501, 0
      %v518 = vsel %vm513, %v502, 0
      %520 = vmatpush.bf16.msra.mxu0 0
      %521 = vmatpush.bf16.msra.mxu0 0
      %522 = vmatpush.bf16.msra.mxu0 0
      %523 = vmatpush.bf16.msra.mxu0 0
      %524 = vmatpush.bf16.msra.mxu0 0
      %525 = vmatpush.bf16.msra.mxu0 %v515
      %526 = vmatpush.bf16.msra.mxu0 %v499
      %527 = vmatpush.bf16.msra.mxu0 %v497
      %528 = vmatmul.bf16.gmra.mxu0 %v511
      %v529 = vpop.f32.mrf.mxu0
      %v530 = vadd.f32 %v507, %v529
      %v531 = vpop.f32.mrf.mxu0
      %532 = vdwg.mxu0
      %533 = vmatpush.bf16.msra.mxu0 0
      %534 = vmatpush.bf16.msra.mxu0 0
      %535 = vmatpush.bf16.msra.mxu0 0
      %536 = vmatpush.bf16.msra.mxu0 0
      %537 = vmatpush.bf16.msra.mxu0 0
      %538 = vmatpush.bf16.msra.mxu0 %v518
      %539 = vmatpush.bf16.msra.mxu0 %v500
      %540 = vmatpush.bf16.msra.mxu0 %v498
      %541 = vmatmul.bf16.gmra.mxu0 %v511
      %v542 = vpop.f32.mrf.mxu0
      %v543 = vadd.f32 %v507, %v542
      %v544 = vpop.f32.mrf.mxu0
      %545 = vdwg.mxu0
      %vm546 = vcmp.ge.f32.partialorder %v530, 0.0
      %vm547 = vcmp.ge.f32.partialorder %v543, 0.0
      %v548 = vmul.f32 %v530, 0.2
      %v549 = vmul.f32 %v543, 0.2
      %v550 = vsel %vm546, %v530, %v548
      %v551 = vsel %vm547, %v543, %v549
      %552 = vst [vmem:[%s197] sm:$0xff] %v550
      %553 = vst [vmem:[%s197 + $0x8] sm:$0xff] %v551
      %p554 = scmp.lt.s32.totalorder %s15, 1
      %s555 = scalar_select %p554, %s15, 1
      %s556 = smul.addr %s555, 2
      %s557 = smul.addr %s556, 8
      %s558 = scalar_lea.vmem %s4, %s557
      // Predicated region
      $region37: #{conv2d_layer_forward.1} parent=35 // pred_check
        %p559 = pneg %p122
      $region38: #{conv2d_layer_forward.1} parent=35 // pred_check_branch
        %561 = sbr.rel (%p559) target = $region40
      $region39: #{conv2d_layer_forward.1} parent=35 // pred_region
        _
      $region40: #{conv2d_layer_forward.1} parent=35 // pred_fallthru
        _
    $region36: #{conv2d_layer_forward.1} parent=5 // pred_fallthru
      _
    %p562 = scmp.le.s32.totalorder 2, %s10
    // Predicated region
    $region41: #{conv2d_layer_forward.1} parent=5 // pred_check
      %p563 = pneg %p562
    $region42: #{conv2d_layer_forward.1} parent=5 // pred_check_branch
      %565 = sbr.rel (%p563) target = $region44
    $region43: #{conv2d_layer_forward.1} parent=5 // pred_region
      %s566 = ssub.s32 %s10, 2
      // Predicated region
      $region45: #{conv2d_layer_forward.1} parent=43 // pred_check
        %p567 = pneg %p128
      $region46: #{conv2d_layer_forward.1} parent=43 // pred_check_branch
        %569 = sbr.rel (%p567) target = $region48
      $region47: #{conv2d_layer_forward.1} parent=43 // pred_region
        %p570 = scmp.lt.s32.totalorder %s16, 1
        %s571 = scalar_select %p570, %s16, 1
        %s572 = smul.addr %s571, 2
        %s573 = smul.addr %s572, 8
        %s574 = scalar_lea.vmem %s4, %s573
      $region48: #{conv2d_layer_forward.1} parent=43 // pred_fallthru
        _
    $region44: #{conv2d_layer_forward.1} parent=5 // pred_fallthru
      _
  $region6: #{conv2d_layer_forward.1} parent=0 // loop_footer
    %s14 = sadd.s32 1, %s10
  $region7: #{conv2d_layer_forward.1} parent=0 // loop_footer_branch
    %9 = sbr.rel target = $region3
  $region8: #{conv2d_layer_forward.1} parent=0 // loop_exit
    _

</llo_original>
